<compile_context>
chip_gen: v5e
topology: v5e:2x2
jax: 0.10.0
libtpu: 0.0.40
codegen_flags: <defaults>
</compile_context>

<pallas_src>
import jax
import jax.numpy as jnp
from jax.experimental import pallas as pl
from jax.experimental.pallas import tpu as pltpu

LANE = 128  # lane-dense padded width for the classifier output
OUT_ROWS = 8  # sublane-dense padded height of the per-batch output tile


def _layernorm(x, gamma, beta, eps=1e-12):
    # single-pass E[x^2] - E[x]^2 form (halves dependent XLU lane-reductions)
    mu = jnp.mean(x, axis=-1, keepdims=True)
    ms = jnp.mean(x * x, axis=-1, keepdims=True)
    var = jnp.maximum(ms - mu * mu, 0.0)
    return gamma * (x - mu) * jax.lax.rsqrt(var + eps) + beta


def fused_kernel(x_ref,       # [S, H] f32  : embeddings for this batch row
                 aux_ref,     # [2, S] f32  : row 0 = mask bias, row 1 = mean weights
                 wqkvb_ref,   # [H+1, 3H] bf16 : rows 0..H-1 = Wqkv, row H = bqkv
                 wob_ref,     # [H+1, H]  bf16 : Wo | bo
                 ln_ref,      # [4, H]    f32  : ln1 gamma/beta, ln2 gamma/beta
                 w1b_ref,     # [H+1, F]  bf16 : W1 | b1
                 w2b_ref,     # [F+1, H]  bf16 : W2 | b2
                 wlinb_ref,   # [2H+1, LANE] bf16 : W_lin (padded) | b_lin (padded)
                 out_ref):    # [OUT_ROWS, LANE] f32
    S, H = x_ref.shape
    F = w1b_ref.shape[1]
    bf16 = jnp.bfloat16

    x = x_ref[...]                                   # [S, H] f32
    mbias = aux_ref[0:1, :]                          # [1, S] additive attention bias
    mw = aux_ref[1:2, :]                             # [1, S] masked-mean weights

    # ---- single-head self-attention (fused QKV, one MXU pass) ---------------
    xb = x.astype(bf16)
    wqkv = wqkvb_ref[0:H, :]
    bqkv = wqkvb_ref[H:H + 1, :].astype(jnp.float32)
    qkv = jnp.dot(xb, wqkv, preferred_element_type=jnp.float32) + bqkv   # [S, 3H]
    q = qkv[:, 0:H]
    k = qkv[:, H:2 * H]
    v = qkv[:, 2 * H:3 * H]

    # TODO(synk): head_dim == H is correct only for this single-head synthetic encoder.
    scale = 1.0 / (H ** 0.5)
    s = jnp.einsum('qd,kd->qk', q.astype(bf16), k.astype(bf16),
                   preferred_element_type=jnp.float32) * scale           # [S, S]
    s = s + mbias
    s = s - jnp.max(s, axis=-1, keepdims=True)
    p = jnp.exp(s)
    p = p * pl.reciprocal(jnp.sum(p, axis=-1, keepdims=True), approx=True)

    ctx = jnp.dot(p.astype(bf16), v.astype(bf16),
                  preferred_element_type=jnp.float32)                    # [S, H]
    wo = wob_ref[0:H, :]
    bo = wob_ref[H:H + 1, :].astype(jnp.float32)
    attn = jnp.dot(ctx.astype(bf16), wo, preferred_element_type=jnp.float32) + bo

    h1 = _layernorm(x + attn, ln_ref[0:1, :], ln_ref[1:2, :])            # [S, H] f32

    # ---- feed-forward --------------------------------------------------------
    w1 = w1b_ref[0:H, :]
    b1 = w1b_ref[H:H + 1, :].astype(jnp.float32)
    ff = jax.nn.gelu(
        jnp.dot(h1.astype(bf16), w1, preferred_element_type=jnp.float32) + b1,
        approximate=True)
    w2 = w2b_ref[0:F, :]
    b2 = w2b_ref[F:F + 1, :].astype(jnp.float32)
    ff2 = jnp.dot(ff.astype(bf16), w2, preferred_element_type=jnp.float32) + b2
    hidden = _layernorm(h1 + ff2, ln_ref[2:3, :], ln_ref[3:4, :])        # last_hidden_state

    # ---- PosModel head: cls token + masked mean over [fi, li) ---------------
    cls = hidden[0:1, :]                                                 # [1, H]
    avg = jnp.dot(mw, hidden, preferred_element_type=jnp.float32)        # [1, H]

    # concat(cls, avg) @ W_lin == cls @ W_lin[:H] + avg @ W_lin[H:2H]
    wc = wlinb_ref[0:H, :]
    wa = wlinb_ref[H:2 * H, :]
    blin = wlinb_ref[2 * H:2 * H + 1, :].astype(jnp.float32)
    logits = (jnp.dot(cls.astype(bf16), wc, preferred_element_type=jnp.float32)
              + jnp.dot(avg.astype(bf16), wa, preferred_element_type=jnp.float32)
              + blin)                                                    # [1, LANE]

    # lane- and sublane-dense unmasked store; wrapper slices row 0 / first L lanes.
    out_ref[...] = jnp.broadcast_to(logits, out_ref.shape).astype(out_ref.dtype)


def pos_model_forward(input_ids, attn_mask, indexes, params):
    B, S = input_ids.shape
    H = params["word_emb"].shape[1]
    L = params["w_lin"].shape[1]
    bf16 = jnp.bfloat16

    # Embedding lookup: plain JAX gather glue (no Pallas equivalent needed).
    x_emb = (params["word_emb"][input_ids] + params["pos_emb"][None, :, :]).astype(jnp.float32)

    # Host-precomputed aux slab: row 0 = additive attention-mask bias,
    # row 1 = masked-mean weights sel/cnt (cnt clamped to >= 1: NaN guard).
    mbias = (1.0 - attn_mask.astype(jnp.float32)) * (-1e9)               # [B, S]
    fi = indexes[:, 0:1].astype(jnp.int32)
    li = indexes[:, 1:2].astype(jnp.int32)
    pos = jnp.arange(S, dtype=jnp.int32)[None, :]                        # [1, S]
    sel = jnp.logical_and(pos >= fi, pos < li).astype(jnp.float32)       # [B, S]
    cnt = jnp.maximum(li - fi, 1).astype(jnp.float32)                    # [B, 1]
    aux = jnp.stack([mbias, sel / cnt], axis=1)                          # [B, 2, S] f32

    # Weight slabs: bias row appended to each weight matrix, stored bf16 (MXU-native).
    wqkvb = jnp.concatenate([params["wqkv"], params["bqkv"]], axis=0).astype(bf16)   # [H+1, 3H]
    wob = jnp.concatenate([params["wo"], params["bo"]], axis=0).astype(bf16)         # [H+1, H]
    w1b = jnp.concatenate([params["w1"], params["b1"]], axis=0).astype(bf16)         # [H+1, F]
    w2b = jnp.concatenate([params["w2"], params["b2"]], axis=0).astype(bf16)         # [F+1, H]
    wlin_p = jnp.zeros((2 * H, LANE), jnp.float32).at[:, :L].set(params["w_lin"])
    blin_p = jnp.zeros((1, LANE), jnp.float32).at[:, :L].set(params["b_lin"])
    wlinb = jnp.concatenate([wlin_p, blin_p], axis=0).astype(bf16)                   # [2H+1, LANE]
    ln = jnp.concatenate([params["ln1"], params["ln2"]], axis=0).astype(jnp.float32) # [4, H] f32

    grid_spec = pltpu.PrefetchScalarGridSpec(
        num_scalar_prefetch=0,
        grid=(B,),                                                       # batch axis, parallel
        in_specs=[
            pl.BlockSpec((None, S, H), lambda b: (b, 0, 0)),             # x_emb (per batch row)
            pl.BlockSpec((None, 2, S), lambda b: (b, 0, 0)),             # aux   (per batch row)
            pl.BlockSpec(wqkvb.shape, lambda b: (0, 0)),                 # Wqkv|bqkv (grid-invariant)
            pl.BlockSpec(wob.shape, lambda b: (0, 0)),                   # Wo|bo
            pl.BlockSpec(ln.shape, lambda b: (0, 0)),                    # ln1/ln2 gamma,beta
            pl.BlockSpec(w1b.shape, lambda b: (0, 0)),                   # W1|b1
            pl.BlockSpec(w2b.shape, lambda b: (0, 0)),                   # W2|b2
            pl.BlockSpec(wlinb.shape, lambda b: (0, 0)),                 # W_lin|b_lin (padded)
        ],
        out_specs=pl.BlockSpec((None, OUT_ROWS, LANE), lambda b: (b, 0, 0)),
    )

    out_padded = pl.pallas_call(
        fused_kernel,
        out_shape=jax.ShapeDtypeStruct((B, OUT_ROWS, LANE), jnp.float32),
        grid_spec=grid_spec,
        compiler_params=pltpu.CompilerParams(
            dimension_semantics=("parallel",),      # v7x: batch rows across both TCs
            vmem_limit_bytes=32 * 1024 * 1024,      # explicit budget (safe on v5e/v6e/v7x)
        ),
    )(x_emb, aux, wqkvb, wob, ln, w1b, w2b, wlinb)

    return out_padded[:, 0, :L]


if __name__ == "__main__":
    B, S, H, F, L, V = 2, 8, 32, 64, 4, 100   # 2*H = 64 plays the role of 1536

    key = jax.random.PRNGKey(0)
    ks = jax.random.split(key, 8)

    params = {
        "word_emb": 0.02 * jax.random.normal(ks[0], (V, H), jnp.float32),
        "pos_emb":  0.02 * jax.random.normal(ks[1], (S, H), jnp.float32),
        "wqkv": 0.02 * jax.random.normal(ks[2], (H, 3 * H), jnp.float32),
        "bqkv": jnp.zeros((1, 3 * H), jnp.float32),
        "wo":   0.02 * jax.random.normal(ks[3], (H, H), jnp.float32),
        "bo":   jnp.zeros((1, H), jnp.float32),
        "ln1":  jnp.stack([jnp.ones((H,), jnp.float32), jnp.zeros((H,), jnp.float32)]),
        "w1":   0.02 * jax.random.normal(ks[4], (H, F), jnp.float32),
        "b1":   jnp.zeros((1, F), jnp.float32),
        "w2":   0.02 * jax.random.normal(ks[5], (F, H), jnp.float32),
        "b2":   jnp.zeros((1, H), jnp.float32),
        "ln2":  jnp.stack([jnp.ones((H,), jnp.float32), jnp.zeros((H,), jnp.float32)]),
        # nn.Linear(1536, 4): stored here already transposed, shape [2H, L]
        "w_lin": 0.02 * jax.random.normal(ks[6], (2 * H, L), jnp.float32),
        "b_lin": jnp.zeros((1, L), jnp.float32),
    }

    input_ids = jax.random.randint(ks[7], (B, S), 0, V, dtype=jnp.int32)
    attn_mask = jnp.array([[1] * S, [1, 1, 1, 1, 1, 1, 0, 0]], jnp.float32)
    indexes = jnp.array([[1, 5], [2, 7]], jnp.int32)

    logits = pos_model_forward(input_ids, attn_mask, indexes, params)
    logits = jax.block_until_ready(logits)
    assert logits.shape == (B, L) and logits.dtype == jnp.float32
    print("KERNEL_OK")
</pallas_src>

<mosaic_0001>
module attributes {stable_mosaic.version = 11 : i64} {
  func.func @fused_kernel(%arg0: i32, %arg1: memref<1x8x32xf32, #tpu.memory_space<vmem>>, %arg2: memref<1x2x8xf32, #tpu.memory_space<vmem>>, %arg3: memref<33x96xbf16, #tpu.memory_space<vmem>>, %arg4: memref<33x32xbf16, #tpu.memory_space<vmem>>, %arg5: memref<4x32xf32, #tpu.memory_space<vmem>>, %arg6: memref<33x64xbf16, #tpu.memory_space<vmem>>, %arg7: memref<65x32xbf16, #tpu.memory_space<vmem>>, %arg8: memref<65x128xbf16, #tpu.memory_space<vmem>>, %arg9: memref<1x8x128xf32, #tpu.memory_space<vmem>>) attributes {dimension_semantics = [#tpu.dimension_semantics<parallel>], iteration_bounds = array<i64: 2>, scalar_prefetch = 0 : i64, scratch_operands = 0 : i64, tpu.core_type = #tpu.core_type<tc>, window_params = [{transform_indices = @transform_0, window_bounds = array<i64: 1, 8, 32>}, {transform_indices = @transform_1, window_bounds = array<i64: 1, 2, 8>}, {pipeline_mode = #tpu.pipeline_mode<synchronous>, transform_indices = @transform_2, window_bounds = array<i64: 33, 96>}, {pipeline_mode = #tpu.pipeline_mode<synchronous>, transform_indices = @transform_3, window_bounds = array<i64: 33, 32>}, {pipeline_mode = #tpu.pipeline_mode<synchronous>, transform_indices = @transform_4, window_bounds = array<i64: 4, 32>}, {pipeline_mode = #tpu.pipeline_mode<synchronous>, transform_indices = @transform_5, window_bounds = array<i64: 33, 64>}, {pipeline_mode = #tpu.pipeline_mode<synchronous>, transform_indices = @transform_6, window_bounds = array<i64: 65, 32>}, {pipeline_mode = #tpu.pipeline_mode<synchronous>, transform_indices = @transform_7, window_bounds = array<i64: 65, 128>}, {transform_indices = @transform_8, window_bounds = array<i64: 1, 8, 128>}]} {
    %c0 = arith.constant 0 : index
    %c0_0 = arith.constant 0 : index
    %c0_1 = arith.constant 0 : index
    %0 = vector.load %arg1[%c0, %c0_0, %c0_1] : memref<1x8x32xf32, #tpu.memory_space<vmem>>, vector<1x8x32xf32>
    %1 = vector.shape_cast %0 : vector<1x8x32xf32> to vector<8x32xf32>
    %c0_2 = arith.constant 0 : index
    %c0_3 = arith.constant 0 : index
    %c0_4 = arith.constant 0 : index
    %2 = vector.load %arg2[%c0_2, %c0_3, %c0_4] : memref<1x2x8xf32, #tpu.memory_space<vmem>>, vector<1x1x8xf32>
    %3 = vector.shape_cast %2 : vector<1x1x8xf32> to vector<1x8xf32>
    %c0_5 = arith.constant 0 : index
    %c1 = arith.constant 1 : index
    %c0_6 = arith.constant 0 : index
    %4 = vector.load %arg2[%c0_5, %c1, %c0_6] : memref<1x2x8xf32, #tpu.memory_space<vmem>>, vector<1x1x8xf32>
    %5 = vector.shape_cast %4 : vector<1x1x8xf32> to vector<1x8xf32>
    %6 = arith.truncf %1 : vector<8x32xf32> to vector<8x32xbf16>
    %c0_7 = arith.constant 0 : index
    %c0_8 = arith.constant 0 : index
    %7 = vector.load %arg3[%c0_7, %c0_8] : memref<33x96xbf16, #tpu.memory_space<vmem>>, vector<32x96xbf16>
    %c32 = arith.constant 32 : index
    %c0_9 = arith.constant 0 : index
    %8 = vector.load %arg3[%c32, %c0_9] : memref<33x96xbf16, #tpu.memory_space<vmem>>, vector<1x96xbf16>
    %9 = arith.extf %8 : vector<1x96xbf16> to vector<1x96xf32>
    %cst = arith.constant dense<0.000000e+00> : vector<8x96xf32>
    %10 = tpu.matmul %6, %7, %cst {dimension_numbers = #tpu.dot_dimension_numbers<[1], [0], [0], [1], [0, 0, 1, 1], [], []>} : vector<8x32xbf16>, vector<32x96xbf16>, vector<8x96xf32> -> vector<8x96xf32>
    %11 = vector.broadcast %9 : vector<1x96xf32> to vector<8x96xf32>
    %12 = arith.addf %10, %11 : vector<8x96xf32>
    %13 = vector.extract_strided_slice %12 {offsets = [0, 0], sizes = [8, 32], strides = [1, 1]} : vector<8x96xf32> to vector<8x32xf32>
    %14 = vector.extract_strided_slice %12 {offsets = [0, 32], sizes = [8, 32], strides = [1, 1]} : vector<8x96xf32> to vector<8x32xf32>
    %15 = vector.extract_strided_slice %12 {offsets = [0, 64], sizes = [8, 32], strides = [1, 1]} : vector<8x96xf32> to vector<8x32xf32>
    %16 = arith.truncf %13 : vector<8x32xf32> to vector<8x32xbf16>
    %17 = arith.truncf %14 : vector<8x32xf32> to vector<8x32xbf16>
    "tpu.trace_start"() <{level = 10 : i32, message = "qd,kd->qk"}> : () -> ()
    %cst_10 = arith.constant dense<0.000000e+00> : vector<8x8xf32>
    %18 = tpu.matmul %16, %17, %cst_10 {dimension_numbers = #tpu.dot_dimension_numbers<[1], [1], [0], [0], [0, 0, 1, 0], [], []>} : vector<8x32xbf16>, vector<8x32xbf16>, vector<8x8xf32> -> vector<8x8xf32>
    "tpu.trace_stop"() : () -> ()
    %cst_11 = arith.constant 0.176776692 : f32
    %19 = vector.broadcast %cst_11 : f32 to vector<8x8xf32>
    %20 = arith.mulf %18, %19 : vector<8x8xf32>
    %21 = vector.broadcast %3 : vector<1x8xf32> to vector<8x8xf32>
    %22 = arith.addf %20, %21 : vector<8x8xf32>
    %cst_12 = arith.constant dense<0xFF800000> : vector<8xf32>
    %23 = vector.multi_reduction <maximumf>, %22, %cst_12 [1] : vector<8x8xf32> to vector<8xf32>
    %24 = vector.shape_cast %23 : vector<8xf32> to vector<8x1xf32>
    %25 = vector.broadcast %24 : vector<8x1xf32> to vector<8x8xf32>
    %26 = arith.subf %22, %25 : vector<8x8xf32>
    %27 = math.exp %26 : vector<8x8xf32>
    %cst_13 = arith.constant dense<0.000000e+00> : vector<8xf32>
    %28 = vector.multi_reduction <add>, %27, %cst_13 [1] : vector<8x8xf32> to vector<8xf32>
    %29 = vector.shape_cast %28 : vector<8xf32> to vector<8x1xf32>
    %30 = tpu.reciprocal %29 {approx = true} : vector<8x1xf32> -> vector<8x1xf32>
    %31 = vector.broadcast %30 : vector<8x1xf32> to vector<8x8xf32>
    %32 = arith.mulf %27, %31 : vector<8x8xf32>
    %33 = arith.truncf %32 : vector<8x8xf32> to vector<8x8xbf16>
    %34 = arith.truncf %15 : vector<8x32xf32> to vector<8x32xbf16>
    %cst_14 = arith.constant dense<0.000000e+00> : vector<8x32xf32>
    %35 = tpu.matmul %33, %34, %cst_14 {dimension_numbers = #tpu.dot_dimension_numbers<[1], [0], [0], [1], [0, 0, 1, 1], [], []>} : vector<8x8xbf16>, vector<8x32xbf16>, vector<8x32xf32> -> vector<8x32xf32>
    %c0_15 = arith.constant 0 : index
    %c0_16 = arith.constant 0 : index
    %36 = vector.load %arg4[%c0_15, %c0_16] : memref<33x32xbf16, #tpu.memory_space<vmem>>, vector<32x32xbf16>
    %c32_17 = arith.constant 32 : index
    %c0_18 = arith.constant 0 : index
    %37 = vector.load %arg4[%c32_17, %c0_18] : memref<33x32xbf16, #tpu.memory_space<vmem>>, vector<1x32xbf16>
    %38 = arith.extf %37 : vector<1x32xbf16> to vector<1x32xf32>
    %39 = arith.truncf %35 : vector<8x32xf32> to vector<8x32xbf16>
    %cst_19 = arith.constant dense<0.000000e+00> : vector<8x32xf32>
    %40 = tpu.matmul %39, %36, %cst_19 {dimension_numbers = #tpu.dot_dimension_numbers<[1], [0], [0], [1], [0, 0, 1, 1], [], []>} : vector<8x32xbf16>, vector<32x32xbf16>, vector<8x32xf32> -> vector<8x32xf32>
    %41 = vector.broadcast %38 : vector<1x32xf32> to vector<8x32xf32>
    %42 = arith.addf %40, %41 : vector<8x32xf32>
    %43 = arith.addf %1, %42 : vector<8x32xf32>
    %c0_20 = arith.constant 0 : index
    %c0_21 = arith.constant 0 : index
    %44 = vector.load %arg5[%c0_20, %c0_21] : memref<4x32xf32, #tpu.memory_space<vmem>>, vector<1x32xf32>
    %c1_22 = arith.constant 1 : index
    %c0_23 = arith.constant 0 : index
    %45 = vector.load %arg5[%c1_22, %c0_23] : memref<4x32xf32, #tpu.memory_space<vmem>>, vector<1x32xf32>
    %cst_24 = arith.constant dense<0.000000e+00> : vector<8xf32>
    %46 = vector.multi_reduction <add>, %43, %cst_24 [1] : vector<8x32xf32> to vector<8xf32>
    %47 = vector.shape_cast %46 : vector<8xf32> to vector<8x1xf32>
    %cst_25 = arith.constant 3.200000e+01 : f32
    %48 = vector.broadcast %cst_25 : f32 to vector<8x1xf32>
    %49 = arith.divf %47, %48 : vector<8x1xf32>
    %50 = arith.mulf %43, %43 : vector<8x32xf32>
    %cst_26 = arith.constant dense<0.000000e+00> : vector<8xf32>
    %51 = vector.multi_reduction <add>, %50, %cst_26 [1] : vector<8x32xf32> to vector<8xf32>
    %52 = vector.shape_cast %51 : vector<8xf32> to vector<8x1xf32>
    %cst_27 = arith.constant 3.200000e+01 : f32
    %53 = vector.broadcast %cst_27 : f32 to vector<8x1xf32>
    %54 = arith.divf %52, %53 : vector<8x1xf32>
    %55 = arith.mulf %49, %49 : vector<8x1xf32>
    %56 = arith.subf %54, %55 : vector<8x1xf32>
    %cst_28 = arith.constant 0.000000e+00 : f32
    %57 = vector.broadcast %cst_28 : f32 to vector<8x1xf32>
    %58 = arith.maximumf %56, %57 : vector<8x1xf32>
    %59 = vector.broadcast %49 : vector<8x1xf32> to vector<8x32xf32>
    %60 = arith.subf %43, %59 : vector<8x32xf32>
    %61 = vector.broadcast %44 : vector<1x32xf32> to vector<8x32xf32>
    %62 = arith.mulf %61, %60 : vector<8x32xf32>
    %cst_29 = arith.constant 9.99999996E-13 : f32
    %63 = vector.broadcast %cst_29 : f32 to vector<8x1xf32>
    %64 = arith.addf %58, %63 : vector<8x1xf32>
    %65 = math.rsqrt %64 : vector<8x1xf32>
    %66 = vector.broadcast %65 : vector<8x1xf32> to vector<8x32xf32>
    %67 = arith.mulf %62, %66 : vector<8x32xf32>
    %68 = vector.broadcast %45 : vector<1x32xf32> to vector<8x32xf32>
    %69 = arith.addf %67, %68 : vector<8x32xf32>
    %c0_30 = arith.constant 0 : index
    %c0_31 = arith.constant 0 : index
    %70 = vector.load %arg6[%c0_30, %c0_31] : memref<33x64xbf16, #tpu.memory_space<vmem>>, vector<32x64xbf16>
    %c32_32 = arith.constant 32 : index
    %c0_33 = arith.constant 0 : index
    %71 = vector.load %arg6[%c32_32, %c0_33] : memref<33x64xbf16, #tpu.memory_space<vmem>>, vector<1x64xbf16>
    %72 = arith.extf %71 : vector<1x64xbf16> to vector<1x64xf32>
    %73 = arith.truncf %69 : vector<8x32xf32> to vector<8x32xbf16>
    %cst_34 = arith.constant dense<0.000000e+00> : vector<8x64xf32>
    %74 = tpu.matmul %73, %70, %cst_34 {dimension_numbers = #tpu.dot_dimension_numbers<[1], [0], [0], [1], [0, 0, 1, 1], [], []>} : vector<8x32xbf16>, vector<32x64xbf16>, vector<8x64xf32> -> vector<8x64xf32>
    %75 = vector.broadcast %72 : vector<1x64xf32> to vector<8x64xf32>
    %76 = arith.addf %74, %75 : vector<8x64xf32>
    %77 = arith.mulf %76, %76 : vector<8x64xf32>
    %78 = arith.mulf %76, %77 : vector<8x64xf32>
    %cst_35 = arith.constant 4.471500e-02 : f32
    %79 = vector.broadcast %cst_35 : f32 to vector<8x64xf32>
    %80 = arith.mulf %79, %78 : vector<8x64xf32>
    %81 = arith.addf %76, %80 : vector<8x64xf32>
    %cst_36 = arith.constant 0.797884583 : f32
    %82 = vector.broadcast %cst_36 : f32 to vector<8x64xf32>
    %83 = arith.mulf %82, %81 : vector<8x64xf32>
    %84 = math.tanh %83 : vector<8x64xf32>
    %cst_37 = arith.constant 1.000000e+00 : f32
    %85 = vector.broadcast %cst_37 : f32 to vector<8x64xf32>
    %86 = arith.addf %85, %84 : vector<8x64xf32>
    %cst_38 = arith.constant 5.000000e-01 : f32
    %87 = vector.broadcast %cst_38 : f32 to vector<8x64xf32>
    %88 = arith.mulf %87, %86 : vector<8x64xf32>
    %89 = arith.mulf %76, %88 : vector<8x64xf32>
    %c0_39 = arith.constant 0 : index
    %c0_40 = arith.constant 0 : index
    %90 = vector.load %arg7[%c0_39, %c0_40] : memref<65x32xbf16, #tpu.memory_space<vmem>>, vector<64x32xbf16>
    %c64 = arith.constant 64 : index
    %c0_41 = arith.constant 0 : index
    %91 = vector.load %arg7[%c64, %c0_41] : memref<65x32xbf16, #tpu.memory_space<vmem>>, vector<1x32xbf16>
    %92 = arith.extf %91 : vector<1x32xbf16> to vector<1x32xf32>
    %93 = arith.truncf %89 : vector<8x64xf32> to vector<8x64xbf16>
    %cst_42 = arith.constant dense<0.000000e+00> : vector<8x32xf32>
    %94 = tpu.matmul %93, %90, %cst_42 {dimension_numbers = #tpu.dot_dimension_numbers<[1], [0], [0], [1], [0, 0, 1, 1], [], []>} : vector<8x64xbf16>, vector<64x32xbf16>, vector<8x32xf32> -> vector<8x32xf32>
    %95 = vector.broadcast %92 : vector<1x32xf32> to vector<8x32xf32>
    %96 = arith.addf %94, %95 : vector<8x32xf32>
    %97 = arith.addf %69, %96 : vector<8x32xf32>
    %c2 = arith.constant 2 : index
    %c0_43 = arith.constant 0 : index
    %98 = vector.load %arg5[%c2, %c0_43] : memref<4x32xf32, #tpu.memory_space<vmem>>, vector<1x32xf32>
    %c3 = arith.constant 3 : index
    %c0_44 = arith.constant 0 : index
    %99 = vector.load %arg5[%c3, %c0_44] : memref<4x32xf32, #tpu.memory_space<vmem>>, vector<1x32xf32>
    %cst_45 = arith.constant dense<0.000000e+00> : vector<8xf32>
    %100 = vector.multi_reduction <add>, %97, %cst_45 [1] : vector<8x32xf32> to vector<8xf32>
    %101 = vector.shape_cast %100 : vector<8xf32> to vector<8x1xf32>
    %cst_46 = arith.constant 3.200000e+01 : f32
    %102 = vector.broadcast %cst_46 : f32 to vector<8x1xf32>
    %103 = arith.divf %101, %102 : vector<8x1xf32>
    %104 = arith.mulf %97, %97 : vector<8x32xf32>
    %cst_47 = arith.constant dense<0.000000e+00> : vector<8xf32>
    %105 = vector.multi_reduction <add>, %104, %cst_47 [1] : vector<8x32xf32> to vector<8xf32>
    %106 = vector.shape_cast %105 : vector<8xf32> to vector<8x1xf32>
    %cst_48 = arith.constant 3.200000e+01 : f32
    %107 = vector.broadcast %cst_48 : f32 to vector<8x1xf32>
    %108 = arith.divf %106, %107 : vector<8x1xf32>
    %109 = arith.mulf %103, %103 : vector<8x1xf32>
    %110 = arith.subf %108, %109 : vector<8x1xf32>
    %cst_49 = arith.constant 0.000000e+00 : f32
    %111 = vector.broadcast %cst_49 : f32 to vector<8x1xf32>
    %112 = arith.maximumf %110, %111 : vector<8x1xf32>
    %113 = vector.broadcast %103 : vector<8x1xf32> to vector<8x32xf32>
    %114 = arith.subf %97, %113 : vector<8x32xf32>
    %115 = vector.broadcast %98 : vector<1x32xf32> to vector<8x32xf32>
    %116 = arith.mulf %115, %114 : vector<8x32xf32>
    %cst_50 = arith.constant 9.99999996E-13 : f32
    %117 = vector.broadcast %cst_50 : f32 to vector<8x1xf32>
    %118 = arith.addf %112, %117 : vector<8x1xf32>
    %119 = math.rsqrt %118 : vector<8x1xf32>
    %120 = vector.broadcast %119 : vector<8x1xf32> to vector<8x32xf32>
    %121 = arith.mulf %116, %120 : vector<8x32xf32>
    %122 = vector.broadcast %99 : vector<1x32xf32> to vector<8x32xf32>
    %123 = arith.addf %121, %122 : vector<8x32xf32>
    %124 = vector.extract_strided_slice %123 {offsets = [0, 0], sizes = [1, 32], strides = [1, 1]} : vector<8x32xf32> to vector<1x32xf32>
    %cst_51 = arith.constant dense<0.000000e+00> : vector<1x32xf32>
    %125 = tpu.matmul %5, %123, %cst_51 {dimension_numbers = #tpu.dot_dimension_numbers<[1], [0], [0], [1], [0, 0, 1, 1], [], []>} : vector<1x8xf32>, vector<8x32xf32>, vector<1x32xf32> -> vector<1x32xf32>
    %c0_52 = arith.constant 0 : index
    %c0_53 = arith.constant 0 : index
    %126 = vector.load %arg8[%c0_52, %c0_53] : memref<65x128xbf16, #tpu.memory_space<vmem>>, vector<32x128xbf16>
    %c32_54 = arith.constant 32 : index
    %c0_55 = arith.constant 0 : index
    %127 = vector.load %arg8[%c32_54, %c0_55] : memref<65x128xbf16, #tpu.memory_space<vmem>>, vector<32x128xbf16>
    %c64_56 = arith.constant 64 : index
    %c0_57 = arith.constant 0 : index
    %128 = vector.load %arg8[%c64_56, %c0_57] : memref<65x128xbf16, #tpu.memory_space<vmem>>, vector<1x128xbf16>
    %129 = arith.extf %128 : vector<1x128xbf16> to vector<1x128xf32>
    %130 = arith.truncf %124 : vector<1x32xf32> to vector<1x32xbf16>
    %cst_58 = arith.constant dense<0.000000e+00> : vector<1x128xf32>
    %131 = tpu.matmul %130, %126, %cst_58 {dimension_numbers = #tpu.dot_dimension_numbers<[1], [0], [0], [1], [0, 0, 1, 1], [], []>} : vector<1x32xbf16>, vector<32x128xbf16>, vector<1x128xf32> -> vector<1x128xf32>
    %132 = arith.truncf %125 : vector<1x32xf32> to vector<1x32xbf16>
    %cst_59 = arith.constant dense<0.000000e+00> : vector<1x128xf32>
    %133 = tpu.matmul %132, %127, %cst_59 {dimension_numbers = #tpu.dot_dimension_numbers<[1], [0], [0], [1], [0, 0, 1, 1], [], []>} : vector<1x32xbf16>, vector<32x128xbf16>, vector<1x128xf32> -> vector<1x128xf32>
    %134 = arith.addf %131, %133 : vector<1x128xf32>
    %135 = arith.addf %134, %129 : vector<1x128xf32>
    %136 = vector.shape_cast %135 : vector<1x128xf32> to vector<1x128xf32>
    %137 = vector.broadcast %136 : vector<1x128xf32> to vector<8x128xf32>
    %c0_60 = arith.constant 0 : index
    %c0_61 = arith.constant 0 : index
    %c0_62 = arith.constant 0 : index
    %138 = vector.load %arg9[%c0_60, %c0_61, %c0_62] : memref<1x8x128xf32, #tpu.memory_space<vmem>>, vector<1x8x128xf32>
    %139 = vector.shape_cast %138 : vector<1x8x128xf32> to vector<8x128xf32>
    %140 = vector.shape_cast %137 : vector<8x128xf32> to vector<1x8x128xf32>
    tpu.vector_store %arg9[%c0_60, %c0_61, %c0_62], %140 {strides = array<i32>} : memref<1x8x128xf32, #tpu.memory_space<vmem>>, vector<1x8x128xf32>,
    return
  }
  func.func @transform_0(%arg0: i32) -> (i32, i32, i32) {
    %c0_i32 = arith.constant 0 : i32
    %c0_i32_0 = arith.constant 0 : i32
    %c0_i32_1 = arith.constant 0 : i32
    return %arg0, %c0_i32, %c0_i32_0 : i32, i32, i32
  }
  func.func @transform_1(%arg0: i32) -> (i32, i32, i32) {
    %c0_i32 = arith.constant 0 : i32
    %c0_i32_0 = arith.constant 0 : i32
    %c0_i32_1 = arith.constant 0 : i32
    return %arg0, %c0_i32, %c0_i32_0 : i32, i32, i32
  }
  func.func @transform_2(%arg0: i32) -> (i32, i32) {
    %c0_i32 = arith.constant 0 : i32
    %c0_i32_0 = arith.constant 0 : i32
    %c0_i32_1 = arith.constant 0 : i32
    return %c0_i32, %c0_i32_0 : i32, i32
  }
  func.func @transform_3(%arg0: i32) -> (i32, i32) {
    %c0_i32 = arith.constant 0 : i32
    %c0_i32_0 = arith.constant 0 : i32
    %c0_i32_1 = arith.constant 0 : i32
    return %c0_i32, %c0_i32_0 : i32, i32
  }
  func.func @transform_4(%arg0: i32) -> (i32, i32) {
    %c0_i32 = arith.constant 0 : i32
    %c0_i32_0 = arith.constant 0 : i32
    %c0_i32_1 = arith.constant 0 : i32
    return %c0_i32, %c0_i32_0 : i32, i32
  }
  func.func @transform_5(%arg0: i32) -> (i32, i32) {
    %c0_i32 = arith.constant 0 : i32
    %c0_i32_0 = arith.constant 0 : i32
    %c0_i32_1 = arith.constant 0 : i32
    return %c0_i32, %c0_i32_0 : i32, i32
  }
  func.func @transform_6(%arg0: i32) -> (i32, i32) {
    %c0_i32 = arith.constant 0 : i32
    %c0_i32_0 = arith.constant 0 : i32
    %c0_i32_1 = arith.constant 0 : i32
    return %c0_i32, %c0_i32_0 : i32, i32
  }
  func.func @transform_7(%arg0: i32) -> (i32, i32) {
    %c0_i32 = arith.constant 0 : i32
    %c0_i32_0 = arith.constant 0 : i32
    %c0_i32_1 = arith.constant 0 : i32
    return %c0_i32, %c0_i32_0 : i32, i32
  }
  func.func @transform_8(%arg0: i32) -> (i32, i32, i32) {
    %c0_i32 = arith.constant 0 : i32
    %c0_i32_0 = arith.constant 0 : i32
    %c0_i32_1 = arith.constant 0 : i32
    return %arg0, %c0_i32, %c0_i32_0 : i32, i32, i32
  }
}

</mosaic_0001>

<llo_original>
// kernel: tpu_custom_call.1
$region0: #{tpu_custom_call.1}
  #allocation0 [shape = 'u32[]', space=smem, size = 0x4, offset = 0x4, fixed_abs, tag = 'smem constant byte address 0x4 - core index']
  #allocation1 [shape = 'u32[72,128]{1,0:T(1,128)}', space=vmem, size = 0x9000, scoped, tag = 'internal scratch']
  %s0 = inlined_call_operand.hbm [shape: f32[2,8,32], index: 0, kind: input, shape index: {}]
  %s1 = inlined_call_operand.hbm [shape: f32[2,2,8], index: 1, kind: input, shape index: {}]
  %s2 = inlined_call_operand.vmem [shape: bf16[33,96], index: 2, kind: input, shape index: {}]
  %s3 = inlined_call_operand.vmem [shape: bf16[33,32], index: 3, kind: input, shape index: {}]
  %s4 = inlined_call_operand.hbm [shape: f32[4,32], index: 4, kind: input, shape index: {}]
  %s5 = inlined_call_operand.vmem [shape: bf16[33,64], index: 5, kind: input, shape index: {}]
  %s6 = inlined_call_operand.vmem [shape: bf16[65,32], index: 6, kind: input, shape index: {}]
  %s7 = inlined_call_operand.vmem [shape: bf16[65,128], index: 7, kind: input, shape index: {}]
  %s8 = inlined_call_operand.hbm [shape: f32[2,8,128], index: 8, kind: output, shape index: {}]
  %s9 = sld [smem:[#allocation0]]
  $region77: #{tpu_custom_call.1} parent=0
    _
  %s11 = ssub.s32 1, %s9
  %s12 = scalar_select 0, %s11, %s9
  $region1: #{tpu_custom_call.1} parent=0
    #allocation2 [shape = 'u8[8192]{0}', space=vmem, size = 0x2000, scoped, tag = 'input window, operand 0']
    #allocation3 [shape = 's32[2]{0}', space=sflag, size = 0x8, scoped, tag = 'scoped memory for tpu_custom_call.1']
    #allocation4 [shape = 's32[2]{0}', space=sflag, size = 0x8, scoped, tag = 'scoped memory for tpu_custom_call.1']
    #allocation5 [shape = 'u8[2048]{0}', space=vmem, size = 0x800, scoped, tag = 'input window, operand 1']
    #allocation6 [shape = 's32[2]{0}', space=sflag, size = 0x8, scoped, tag = 'scoped memory for tpu_custom_call.1']
    #allocation7 [shape = 'u8[2048]{0}', space=vmem, size = 0x800, scoped, tag = 'input window, operand 4, single buffered']
    #allocation8 [shape = 'u8[8192]{0}', space=vmem, size = 0x2000, scoped, tag = 'output window, operand 0']
    %13 = vsyncpa [#allocation3], 0
    %s14 = scalar_lea.sflag [#allocation3], 1
    %15 = vsyncpa %s14, 0
    %16 = vsyncpa [#allocation6], 0
    %s17 = scalar_lea.sflag [#allocation6], 1
    %18 = vsyncpa %s17, 0
    %19 = vsyncpa [#allocation4], 0
    %s20 = scalar_lea.sflag [#allocation4], 1
    %21 = vsyncpa %s20, 0
    loop: start=0, step=1, limit=4
    $region2: #{tpu_custom_call.1} parent=1 // loop_pre_header
      _
    $region3: #{tpu_custom_call.1} parent=1 // loop_header
      %s23 = sphi 0, %s27
      %p24 = scmp.ge.s32.totalorder %s23, 4
      %s33 = sphi 0, %s35
      %s36 = sphi 0, %s33
      %s37 = sphi 0, %s36
      %s53 = sphi 0, %s37
      %s59 = sphi 0, %s61
      %s62 = sphi 0, %s59
      %s63 = sphi 0, %s62
      %s79 = sphi 0, %s63
      %s83 = sphi 0, %s83
      %s85 = sphi 0, %s83
      %s86 = sphi 0, %s85
      %s100 = sphi 0, %s86
      %s104 = sphi 0, %s104
      %s106 = sphi 0, %s104
      %s107 = sphi 0, %s106
      %s121 = sphi 0, %s107
      %s125 = sphi 0, %s125
      %s127 = sphi 0, %s125
      %s128 = sphi 0, %s127
      %s142 = sphi 0, %s128
      %s146 = sphi 0, %s146
      %s148 = sphi 0, %s146
      %s149 = sphi 0, %s148
      %s163 = sphi 0, %s149
      %s167 = sphi 0, %s167
      %s169 = sphi 0, %s167
      %s170 = sphi 0, %s169
      %s184 = sphi 0, %s170
      %s188 = sphi 0, %s188
      %s190 = sphi 0, %s188
      %s191 = sphi 0, %s190
      %s205 = sphi 0, %s191
      %s211 = sphi 0, %s213
      %s214 = sphi 0, %s211
      %s215 = sphi 0, %s214
      %s231 = sphi 0, %s215
    $region4: #{tpu_custom_call.1} parent=1 // loop_header_branch
      %26 = sbr.rel (%p24) target = $region8
    $region5: #{tpu_custom_call.1} parent=1 // loop_body
      %s28 = ssub.s32 %s23, 1
      %s29 = ssub.s32 %s23, 2
      %s30 = sadd.s32 %s23, 1
      %s31 = ssub.s32 %s23, %s30
      %p32 = scmp.eq.s32.totalorder %s31, 0
      %s34 = sadd.s32 %s33, 1
      %s35 = scalar_select %p32, %s33, %s34
      %p38 = pneg %p32
      %p39 = scmp.eq.s32.totalorder %s23, 1
      %p40 = por %p38, %p39
      %p41 = scmp.ne.s32.totalorder %s33, %s36
      %p42 = scmp.eq.s32.totalorder %s23, 0
      %p43 = por %p41, %p42
      %p44 = scmp.ne.s32.totalorder %s33, %s36
      %p45 = scmp.eq.s32.totalorder %s28, 1
      %p46 = por %p44, %p45
      %p47 = scmp.ne.s32.totalorder %s36, %s37
      %p48 = scmp.eq.s32.totalorder %s28, 0
      %p49 = por %p47, %p48
      %p50 = scmp.ne.s32.totalorder %s36, %s37
      %p51 = scmp.eq.s32.totalorder %s29, 1
      %p52 = por %p50, %p51
      %p54 = scmp.ne.s32.totalorder %s37, %s53
      %p55 = scmp.eq.s32.totalorder %s29, 0
      %p56 = por %p54, %p55
      %s57 = ssub.s32 %s23, %s30
      %p58 = scmp.eq.s32.totalorder %s57, 0
      %s60 = sadd.s32 %s59, 1
      %s61 = scalar_select %p58, %s59, %s60
      %p64 = pneg %p58
      %p65 = scmp.eq.s32.totalorder %s23, 1
      %p66 = por %p64, %p65
      %p67 = scmp.ne.s32.totalorder %s59, %s62
      %p68 = scmp.eq.s32.totalorder %s23, 0
      %p69 = por %p67, %p68
      %p70 = scmp.ne.s32.totalorder %s59, %s62
      %p71 = scmp.eq.s32.totalorder %s28, 1
      %p72 = por %p70, %p71
      %p73 = scmp.ne.s32.totalorder %s62, %s63
      %p74 = scmp.eq.s32.totalorder %s28, 0
      %p75 = por %p73, %p74
      %p76 = scmp.ne.s32.totalorder %s62, %s63
      %p77 = scmp.eq.s32.totalorder %s29, 1
      %p78 = por %p76, %p77
      %p80 = scmp.ne.s32.totalorder %s63, %s79
      %p81 = scmp.eq.s32.totalorder %s29, 0
      %p82 = por %p80, %p81
      %s84 = sadd.s32 %s83, 1
      %p87 = scmp.eq.s32.totalorder %s23, 1
      %p88 = scmp.ne.s32.totalorder %s83, %s85
      %p89 = scmp.eq.s32.totalorder %s23, 0
      %p90 = por %p88, %p89
      %p91 = scmp.ne.s32.totalorder %s83, %s85
      %p92 = scmp.eq.s32.totalorder %s28, 1
      %p93 = por %p91, %p92
      %p94 = scmp.ne.s32.totalorder %s85, %s86
      %p95 = scmp.eq.s32.totalorder %s28, 0
      %p96 = por %p94, %p95
      %p97 = scmp.ne.s32.totalorder %s85, %s86
      %p98 = scmp.eq.s32.totalorder %s29, 1
      %p99 = por %p97, %p98
      %p101 = scmp.ne.s32.totalorder %s86, %s100
      %p102 = scmp.eq.s32.totalorder %s29, 0
      %p103 = por %p101, %p102
      %s105 = sadd.s32 %s104, 1
      %p108 = scmp.eq.s32.totalorder %s23, 1
      %p109 = scmp.ne.s32.totalorder %s104, %s106
      %p110 = scmp.eq.s32.totalorder %s23, 0
      %p111 = por %p109, %p110
      %p112 = scmp.ne.s32.totalorder %s104, %s106
      %p113 = scmp.eq.s32.totalorder %s28, 1
      %p114 = por %p112, %p113
      %p115 = scmp.ne.s32.totalorder %s106, %s107
      %p116 = scmp.eq.s32.totalorder %s28, 0
      %p117 = por %p115, %p116
      %p118 = scmp.ne.s32.totalorder %s106, %s107
      %p119 = scmp.eq.s32.totalorder %s29, 1
      %p120 = por %p118, %p119
      %p122 = scmp.ne.s32.totalorder %s107, %s121
      %p123 = scmp.eq.s32.totalorder %s29, 0
      %p124 = por %p122, %p123
      %s126 = sadd.s32 %s125, 1
      %p129 = scmp.eq.s32.totalorder %s23, 1
      %p130 = scmp.ne.s32.totalorder %s125, %s127
      %p131 = scmp.eq.s32.totalorder %s23, 0
      %p132 = por %p130, %p131
      %p133 = scmp.ne.s32.totalorder %s125, %s127
      %p134 = scmp.eq.s32.totalorder %s28, 1
      %p135 = por %p133, %p134
      %p136 = scmp.ne.s32.totalorder %s127, %s128
      %p137 = scmp.eq.s32.totalorder %s28, 0
      %p138 = por %p136, %p137
      %p139 = scmp.ne.s32.totalorder %s127, %s128
      %p140 = scmp.eq.s32.totalorder %s29, 1
      %p141 = por %p139, %p140
      %p143 = scmp.ne.s32.totalorder %s128, %s142
      %p144 = scmp.eq.s32.totalorder %s29, 0
      %p145 = por %p143, %p144
      %s147 = sadd.s32 %s146, 1
      %p150 = scmp.eq.s32.totalorder %s23, 1
      %p151 = scmp.ne.s32.totalorder %s146, %s148
      %p152 = scmp.eq.s32.totalorder %s23, 0
      %p153 = por %p151, %p152
      %p154 = scmp.ne.s32.totalorder %s146, %s148
      %p155 = scmp.eq.s32.totalorder %s28, 1
      %p156 = por %p154, %p155
      %p157 = scmp.ne.s32.totalorder %s148, %s149
      %p158 = scmp.eq.s32.totalorder %s28, 0
      %p159 = por %p157, %p158
      %p160 = scmp.ne.s32.totalorder %s148, %s149
      %p161 = scmp.eq.s32.totalorder %s29, 1
      %p162 = por %p160, %p161
      %p164 = scmp.ne.s32.totalorder %s149, %s163
      %p165 = scmp.eq.s32.totalorder %s29, 0
      %p166 = por %p164, %p165
      %s168 = sadd.s32 %s167, 1
      %p171 = scmp.eq.s32.totalorder %s23, 1
      %p172 = scmp.ne.s32.totalorder %s167, %s169
      %p173 = scmp.eq.s32.totalorder %s23, 0
      %p174 = por %p172, %p173
      %p175 = scmp.ne.s32.totalorder %s167, %s169
      %p176 = scmp.eq.s32.totalorder %s28, 1
      %p177 = por %p175, %p176
      %p178 = scmp.ne.s32.totalorder %s169, %s170
      %p179 = scmp.eq.s32.totalorder %s28, 0
      %p180 = por %p178, %p179
      %p181 = scmp.ne.s32.totalorder %s169, %s170
      %p182 = scmp.eq.s32.totalorder %s29, 1
      %p183 = por %p181, %p182
      %p185 = scmp.ne.s32.totalorder %s170, %s184
      %p186 = scmp.eq.s32.totalorder %s29, 0
      %p187 = por %p185, %p186
      %s189 = sadd.s32 %s188, 1
      %p192 = scmp.eq.s32.totalorder %s23, 1
      %p193 = scmp.ne.s32.totalorder %s188, %s190
      %p194 = scmp.eq.s32.totalorder %s23, 0
      %p195 = por %p193, %p194
      %p196 = scmp.ne.s32.totalorder %s188, %s190
      %p197 = scmp.eq.s32.totalorder %s28, 1
      %p198 = por %p196, %p197
      %p199 = scmp.ne.s32.totalorder %s190, %s191
      %p200 = scmp.eq.s32.totalorder %s28, 0
      %p201 = por %p199, %p200
      %p202 = scmp.ne.s32.totalorder %s190, %s191
      %p203 = scmp.eq.s32.totalorder %s29, 1
      %p204 = por %p202, %p203
      %p206 = scmp.ne.s32.totalorder %s191, %s205
      %p207 = scmp.eq.s32.totalorder %s29, 0
      %p208 = por %p206, %p207
      %s209 = ssub.s32 %s23, %s30
      %p210 = scmp.eq.s32.totalorder %s209, 0
      %s212 = sadd.s32 %s211, 1
      %s213 = scalar_select %p210, %s211, %s212
      %p216 = pneg %p210
      %p217 = scmp.eq.s32.totalorder %s23, 1
      %p218 = por %p216, %p217
      %p219 = scmp.ne.s32.totalorder %s211, %s214
      %p220 = scmp.eq.s32.totalorder %s23, 0
      %p221 = por %p219, %p220
      %p222 = scmp.ne.s32.totalorder %s211, %s214
      %p223 = scmp.eq.s32.totalorder %s28, 1
      %p224 = por %p222, %p223
      %p225 = scmp.ne.s32.totalorder %s214, %s215
      %p226 = scmp.eq.s32.totalorder %s28, 0
      %p227 = por %p225, %p226
      %p228 = scmp.ne.s32.totalorder %s214, %s215
      %p229 = scmp.eq.s32.totalorder %s29, 1
      %p230 = por %p228, %p229
      %p232 = scmp.ne.s32.totalorder %s215, %s231
      %p233 = scmp.eq.s32.totalorder %s29, 0
      %p234 = por %p232, %p233
      %p235 = scmp.le.s32.totalorder 1, %s23
      %p236 = scmp.lt.s32.totalorder %s23, 3
      %p237 = pnand %p235, %p236
      %p238 = pneg %p237
      // Predicated region
      $region9: #{tpu_custom_call.1} parent=5 // pred_check
        _
      $region10: #{tpu_custom_call.1} parent=5 // pred_check_branch
        %240 = sbr.rel (%p237) target = $region12
      $region11: #{tpu_custom_call.1} parent=5 // pred_region
        %s241 = ssub.s32 %s23, 1
        // Predicated region
        $region13: #{tpu_custom_call.1} parent=11 // pred_check
          %p242 = pneg %p96
        $region14: #{tpu_custom_call.1} parent=11 // pred_check_branch
          %244 = sbr.rel (%p242) target = $region16
        $region15: #{tpu_custom_call.1} parent=11 // pred_region
          _
        $region16: #{tpu_custom_call.1} parent=11 // pred_fallthru
          _
        // Predicated region
        $region17: #{tpu_custom_call.1} parent=11 // pred_check
          %p245 = pneg %p117
        $region18: #{tpu_custom_call.1} parent=11 // pred_check_branch
          %247 = sbr.rel (%p245) target = $region20
        $region19: #{tpu_custom_call.1} parent=11 // pred_region
          _
        $region20: #{tpu_custom_call.1} parent=11 // pred_fallthru
          _
        // Predicated region
        $region21: #{tpu_custom_call.1} parent=11 // pred_check
          %p248 = pneg %p138
        $region22: #{tpu_custom_call.1} parent=11 // pred_check_branch
          %250 = sbr.rel (%p248) target = $region24
        $region23: #{tpu_custom_call.1} parent=11 // pred_region
          %252 = vsyncadd [#allocation6], 0
          %s254 = sshll.u32 %s4, 4
          %s255 = int_to_ptr.hbm [resolvable:$true] %s254
          %s256 = sshll.u32 [#allocation7], 4
          %s257 = int_to_ptr.vmem [resolvable:$true] %s256
          %259 = dma.hbm_to_vmem [thread:$0]  %s255, 64, %s257, [#allocation6]
        $region24: #{tpu_custom_call.1} parent=11 // pred_fallthru
          _
        // Predicated region
        $region25: #{tpu_custom_call.1} parent=11 // pred_check
          %p260 = pneg %p159
        $region26: #{tpu_custom_call.1} parent=11 // pred_check_branch
          %262 = sbr.rel (%p260) target = $region28
        $region27: #{tpu_custom_call.1} parent=11 // pred_region
          _
        $region28: #{tpu_custom_call.1} parent=11 // pred_fallthru
          _
        // Predicated region
        $region29: #{tpu_custom_call.1} parent=11 // pred_check
          %p263 = pneg %p180
        $region30: #{tpu_custom_call.1} parent=11 // pred_check_branch
          %265 = sbr.rel (%p263) target = $region32
        $region31: #{tpu_custom_call.1} parent=11 // pred_region
          _
        $region32: #{tpu_custom_call.1} parent=11 // pred_fallthru
          _
        // Predicated region
        $region33: #{tpu_custom_call.1} parent=11 // pred_check
          %p266 = pneg %p201
        $region34: #{tpu_custom_call.1} parent=11 // pred_check_branch
          %268 = sbr.rel (%p266) target = $region36
        $region35: #{tpu_custom_call.1} parent=11 // pred_region
          _
        $region36: #{tpu_custom_call.1} parent=11 // pred_fallthru
          _
      $region12: #{tpu_custom_call.1} parent=5 // pred_fallthru
        _
      %p269 = scmp.lt.s32.totalorder %s23, 2
      // Predicated region
      $region37: #{tpu_custom_call.1} parent=5 // pred_check
        %p270 = pneg %p269
      $region38: #{tpu_custom_call.1} parent=5 // pred_check_branch
        %272 = sbr.rel (%p270) target = $region40
      $region39: #{tpu_custom_call.1} parent=5 // pred_region
        // Predicated region
        $region41: #{tpu_custom_call.1} parent=39 // pred_check
          %p273 = pneg %p43
        $region42: #{tpu_custom_call.1} parent=39 // pred_check_branch
          %275 = sbr.rel (%p273) target = $region44
        $region43: #{tpu_custom_call.1} parent=39 // pred_region
          %s276 = sand.u32 %s33, 1
          %s277 = scalar_lea.sflag [#allocation3], %s276
          %s278 = sand.u32 %s33, 1
          %s279 = smul.addr %s278, 8
          %s280 = scalar_lea.vmem [#allocation2], %s279
          %282 = vsyncadd %s277, 0
          %s283 = smul.addr %s23, 8
          %s284 = scalar_lea.hbm %s0, %s283
          %s286 = sshll.u32 %s284, 4
          %s287 = int_to_ptr.hbm [resolvable:$true] %s286
          %s288 = sshll.u32 %s280, 4
          %s289 = int_to_ptr.vmem [resolvable:$true] %s288
          %291 = dma.hbm_to_vmem [thread:$0]  %s287, 128, %s289, %s277
        $region44: #{tpu_custom_call.1} parent=39 // pred_fallthru
          _
        // Predicated region
        $region45: #{tpu_custom_call.1} parent=39 // pred_check
          %p292 = pneg %p69
        $region46: #{tpu_custom_call.1} parent=39 // pred_check_branch
          %294 = sbr.rel (%p292) target = $region48
        $region47: #{tpu_custom_call.1} parent=39 // pred_region
          %s295 = sand.u32 %s23, 1
          %s296 = scalar_lea.sflag [#allocation6], %s295
          %s297 = sand.u32 %s59, 1
          %s298 = smul.addr %s297, 2
          %s299 = scalar_lea.vmem [#allocation5], %s298
          %301 = vsyncadd %s296, 0
          %s302 = smul.addr %s23, 2
          %s303 = scalar_lea.hbm %s1, %s302
          %s305 = sshll.u32 %s303, 4
          %s306 = int_to_ptr.hbm [resolvable:$true] %s305
          %s307 = sshll.u32 %s299, 4
          %s308 = int_to_ptr.vmem [resolvable:$true] %s307
          %310 = dma.hbm_to_vmem [thread:$0]  %s306, 32, %s308, %s296
        $region48: #{tpu_custom_call.1} parent=39 // pred_fallthru
          _
      $region40: #{tpu_custom_call.1} parent=5 // pred_fallthru
        _
      %p311 = scmp.le.s32.totalorder 1, %s23
      %p312 = scmp.lt.s32.totalorder %s23, 3
      %p313 = pnand %p311, %p312
      %p314 = pneg %p313
      // Predicated region
      $region49: #{tpu_custom_call.1} parent=5 // pred_check
        _
      $region50: #{tpu_custom_call.1} parent=5 // pred_check_branch
        %316 = sbr.rel (%p313) target = $region52
      $region51: #{tpu_custom_call.1} parent=5 // pred_region
        %s317 = ssub.s32 %s23, 1
        %s318 = sand.u32 %s36, 1
        %s319 = scalar_lea.sflag [#allocation3], %s318
        %s320 = sand.u32 %s36, 1
        %s321 = smul.addr %s320, 8
        %s322 = scalar_lea.vmem [#allocation2], %s321
        // Predicated region
        $region53: #{tpu_custom_call.1} parent=51 // pred_check
          %p323 = pneg %p49
        $region54: #{tpu_custom_call.1} parent=51 // pred_check_branch
          %325 = sbr.rel (%p323) target = $region56
        $region55: #{tpu_custom_call.1} parent=51 // pred_region
          %327 = dma.done %s319, 128
        $region56: #{tpu_custom_call.1} parent=51 // pred_fallthru
          _
        %s328 = sand.u32 %s28, 1
        %s329 = scalar_lea.sflag [#allocation6], %s328
        %s330 = sand.u32 %s62, 1
        %s331 = smul.addr %s330, 2
        %s332 = scalar_lea.vmem [#allocation5], %s331
        // Predicated region
        $region57: #{tpu_custom_call.1} parent=51 // pred_check
          %p333 = pneg %p75
        $region58: #{tpu_custom_call.1} parent=51 // pred_check_branch
          %335 = sbr.rel (%p333) target = $region60
        $region59: #{tpu_custom_call.1} parent=51 // pred_region
          %337 = dma.done %s329, 32
        $region60: #{tpu_custom_call.1} parent=51 // pred_fallthru
          _
        // Predicated region
        $region61: #{tpu_custom_call.1} parent=51 // pred_check
          %p338 = pneg %p138
        $region62: #{tpu_custom_call.1} parent=51 // pred_check_branch
          %340 = sbr.rel (%p338) target = $region64
        $region63: #{tpu_custom_call.1} parent=51 // pred_region
          %342 = dma.done [#allocation6], 64
        $region64: #{tpu_custom_call.1} parent=51 // pred_fallthru
          _
        %s343 = sand.u32 %s36, 1
        %s344 = scalar_lea.sflag [#allocation3], %s343
        %s345 = sand.u32 %s36, 1
        %s346 = smul.addr %s345, 8
        %s347 = scalar_lea.vmem [#allocation2], %s346
        %p348 = pneg %p49
        %p349 = pneg %p46
        %s350 = sand.u32 %s28, 1
        %s351 = scalar_lea.sflag [#allocation6], %s350
        %s352 = sand.u32 %s62, 1
        %s353 = smul.addr %s352, 2
        %s354 = scalar_lea.vmem [#allocation5], %s353
        %p355 = pneg %p75
        %p356 = pneg %p72
        %p357 = pneg %p96
        %p358 = pneg %p93
        %p359 = pneg %p117
        %p360 = pneg %p114
        %p361 = pneg %p138
        %p362 = pneg %p135
        %p363 = pneg %p159
        %p364 = pneg %p156
        %p365 = pneg %p180
        %p366 = pneg %p177
        %p367 = pneg %p201
        %p368 = pneg %p198
        %p369 = pneg %p227
        %p370 = pneg %p224
        %s371 = sand.u32 %s214, 1
        %s372 = scalar_lea.sflag [#allocation4], %s371
        %s373 = sand.u32 %s214, 1
        %s374 = smul.addr %s373, 8
        %s375 = scalar_lea.vmem [#allocation8], %s374
        %v377 = vld [vmem:[%s322] sm:$0xff]
        %v378 = vld [vmem:[%s332] sm:$0x1]
        %v379 = vld [vmem:[%s332 + $0x1] sm:$0x1]
        %v380 = vpack.c.bf16 %v377, %v377
        %v381 = vld [vmem:[%s2] sm:$0xf]
        %v382 = vld [vmem:[%s2 + $0x4] sm:$0xf]
        %v383 = vld [vmem:[%s2 + $0x8] sm:$0xf]
        %v384 = vld [vmem:[%s2 + $0xc] sm:$0xf]
        %v385 = vld [vmem:[%s2 + $0x10] sm:$0x1]
        %v386 = vunpack.c.l.bf16 %v385
        %v387 = vperm.slane %v386, 0
        %v392 = vunpack.c.l.b16 %v381
        %v393 = vunpack.c.l.b16 %v382
        %v394 = vunpack.c.l.b16 %v383
        %v395 = vunpack.c.l.b16 %v384
        %v396 = vpack.c.b16 %v393, %v392
        %v397 = vpack.c.b16 %v395, %v394
        %vm400 = vcmask 261120
        %v402 = vsel %vm400, %v380, 0
        %404 = vmatpush.bf16.msra.mxu0 0
        %405 = vmatpush.bf16.msra.mxu0 0
        %406 = vmatpush.bf16.msra.mxu0 0
        %407 = vmatpush.bf16.msra.mxu0 0
        %408 = vmatpush.bf16.msra.mxu0 0
        %409 = vmatpush.bf16.msra.mxu0 0
        %410 = vmatpush.bf16.msra.mxu0 %v397
        %411 = vmatpush.bf16.msra.mxu0 %v396
        %412 = vmatmul.bf16.gmra.mxu0 %v402
        %v413 = vpop.f32.mrf.mxu0
        %v414 = vadd.f32 %v387, %v413
        %v415 = vpop.f32.mrf.mxu0
        %416 = vdwg.mxu0
        %v417 = vpack.c.bf16 %v414, %v414
        %419 = vrot.lane.b32.xlu0 %v417, 96
        %v420 = vpop.permute.xlu0 %419
        %v422 = vsel %vm400, %v417, 0
        %v425 = vsel %vm400, %v420, 0
        %427 = vmatpush.bf16.xpose.msra.mxu0 0
        %428 = vmatpush.bf16.xpose.msra.mxu0 0
        %429 = vmatpush.bf16.xpose.msra.mxu0 0
        %430 = vmatpush.bf16.xpose.msra.mxu0 0
        %431 = vmatpush.bf16.xpose.msra.mxu0 0
        %432 = vmatpush.bf16.xpose.msra.mxu0 0
        %433 = vmatpush.bf16.xpose.msra.mxu0 0
        %434 = vmatpush.bf16.xpose.msra.mxu0 %v425
        %435 = vmatmul.bf16.gmra.mxu0 %v422
        %v436 = vpop.f32.mrf.mxu0
        %v437 = vadd.f32 0.0, %v436
        %v438 = vpop.f32.mrf.mxu0
        %439 = vdwg.mxu0
        %v440 = vmul.f32 %v437, 0.17677669
        %v441 = vperm.slane %v378, 0
        %v442 = vadd.f32 %v440, %v441
        %vm443 = vcmask 64512
        %v444 = vsel %vm443, %v442, -inf
        %445 = vmax.xlane.f32.xlu0 %v444
        %v446 = vpop.xlane.xlu0 %445
        %v447 = vsub.f32 %v442, %v446
        %v448 = vmul.f32 %v447, 1.442695
        %v449 = vpow.pop %v448
        %v450 = vsel %vm443, %v449, 0.0
        %451 = vadd.xlane.f32.xlu0 %v450
        %v452 = vpop.xlane.xlu0 %451
        %v453 = vrcp.pop %v452
        %v454 = vmul.f32 %v449, %v453
        %v455 = vpack.c.bf16 %v454, %v454
        %456 = vrot.lane.b32.xlu0 %v417, 64
        %v457 = vpop.permute.xlu0 %456
        %v459 = vsel %vm443, %v455, 0
        %vm461 = vcmask 1043456
        %v463 = vsel %vm461, %v457, 0
        %465 = vmatpush.bf16.msra.mxu0 0
        %466 = vmatpush.bf16.msra.mxu0 0
        %467 = vmatpush.bf16.msra.mxu0 0
        %468 = vmatpush.bf16.msra.mxu0 0
        %469 = vmatpush.bf16.msra.mxu0 0
        %470 = vmatpush.bf16.msra.mxu0 0
        %471 = vmatpush.bf16.msra.mxu0 0
        %472 = vmatpush.bf16.msra.mxu0 %v463
        %473 = vmatmul.bf16.gmra.mxu0 %v459
        %v474 = vpop.f32.mrf.mxu0
        %v475 = vadd.f32 0.0, %v474
        %v476 = vpop.f32.mrf.mxu0
        %477 = vdwg.mxu0
        %v478 = vld [vmem:[%s3] sm:$0xf]
        %v479 = vld [vmem:[%s3 + $0x4] sm:$0xf]
        %v480 = vld [vmem:[%s3 + $0x8] sm:$0xf]
        %v481 = vld [vmem:[%s3 + $0xc] sm:$0xf]
        %v482 = vld [vmem:[%s3 + $0x10] sm:$0x1]
        %v483 = vunpack.c.l.bf16 %v482
        %v484 = vpack.c.bf16 %v475, %v475
        %v485 = vperm.slane %v483, 0
        %v490 = vunpack.c.l.b16 %v478
        %v491 = vunpack.c.l.b16 %v479
        %v492 = vunpack.c.l.b16 %v480
        %v493 = vunpack.c.l.b16 %v481
        %v494 = vpack.c.b16 %v491, %v490
        %v495 = vpack.c.b16 %v493, %v492
        %v499 = vsel %vm400, %v484, 0
        %501 = vmatpush.bf16.msra.mxu0 0
        %502 = vmatpush.bf16.msra.mxu0 0
        %503 = vmatpush.bf16.msra.mxu0 0
        %504 = vmatpush.bf16.msra.mxu0 0
        %505 = vmatpush.bf16.msra.mxu0 0
        %506 = vmatpush.bf16.msra.mxu0 0
        %507 = vmatpush.bf16.msra.mxu0 %v495
        %508 = vmatpush.bf16.msra.mxu0 %v494
        %509 = vmatmul.bf16.gmra.mxu0 %v499
        %v510 = vpop.f32.mrf.mxu0
        %v511 = vadd.f32 %v485, %v510
        %v512 = vpop.f32.mrf.mxu0
        %513 = vdwg.mxu0
        %v514 = vadd.f32 %v377, %v511
        %v515 = vld [vmem:[#allocation7] sm:$0x1]
        %v516 = vld [vmem:[#allocation7 + $0x1] sm:$0x1]
        %v517 = vsel %vm400, %v514, 0.0
        %518 = vadd.xlane.f32.xlu0 %v517
        %v519 = vpop.xlane.xlu0 %518
        %v520 = vrcp.pop 32.0
        %v521 = vmul.f32 32.0, %v520
        %v522 = vsub.f32 1.0, %v521
        %v523 = vmul.f32 %v520, %v522
        %v524 = vadd.f32 %v520, %v523
        %vm525 = vweird.f32 %v520
        %v526 = vsel %vm525, %v520, %v524
        %v527 = vmul.f32 %v519, %v526
        %v528 = vmul.f32 %v514, %v514
        %v529 = vsel %vm400, %v528, 0.0
        %530 = vadd.xlane.f32.xlu0 %v529
        %v531 = vpop.xlane.xlu0 %530
        %v532 = vmul.f32 %v531, %v526
        %v533 = vmul.f32 %v527, %v527
        %v534 = vsub.f32 %v532, %v533
        %v535 = vmax.f32 %v534, 0.0
        %v536 = vsub.f32 %v514, %v527
        %v537 = vperm.slane %v515, 0
        %v538 = vmul.f32 %v537, %v536
        %v539 = vadd.f32 %v535, 1e-12
        %v540 = vrsqrt.pop %v539
        %v541 = vmul.f32 %v540, %v539
        %v542 = vmul.f32 %v541, %v540
        %v543 = vmul.f32 0.5, %v542
        %v544 = vsub.f32 1.5, %v543
        %v545 = vmul.f32 %v540, %v544
        %vm546 = vweird.f32 %v539
        %vm547 = vweird.f32 %v540
        %vm548 = vmor %vm546, %vm547
        %v549 = vsel %vm548, %v540, %v545
        %v550 = vmul.f32 %v538, %v549
        %v551 = vperm.slane %v516, 0
        %v552 = vadd.f32 %v550, %v551
        %v553 = vld [vmem:[%s5] sm:$0xf]
        %v554 = vld [vmem:[%s5 + $0x4] sm:$0xf]
        %v555 = vld [vmem:[%s5 + $0x8] sm:$0xf]
        %v556 = vld [vmem:[%s5 + $0xc] sm:$0xf]
        %v557 = vld [vmem:[%s5 + $0x10] sm:$0x1]
        %v558 = vunpack.c.l.bf16 %v557
        %v559 = vpack.c.bf16 %v552, %v552
        %v560 = vperm.slane %v558, 0
        %v565 = vunpack.c.l.b16 %v553
        %v566 = vunpack.c.l.b16 %v554
        %v567 = vunpack.c.l.b16 %v555
        %v568 = vunpack.c.l.b16 %v556
        %v569 = vpack.c.b16 %v566, %v565
        %v570 = vpack.c.b16 %v568, %v567
        %v574 = vsel %vm400, %v559, 0
        %576 = vmatpush.bf16.msra.mxu0 0
        %577 = vmatpush.bf16.msra.mxu0 0
        %578 = vmatpush.bf16.msra.mxu0 0
        %579 = vmatpush.bf16.msra.mxu0 0
        %580 = vmatpush.bf16.msra.mxu0 0
        %581 = vmatpush.bf16.msra.mxu0 0
        %582 = vmatpush.bf16.msra.mxu0 %v570
        %583 = vmatpush.bf16.msra.mxu0 %v569
        %584 = vmatmul.bf16.gmra.mxu0 %v574
        %v585 = vpop.f32.mrf.mxu0
        %v586 = vadd.f32 %v560, %v585
        %v587 = vpop.f32.mrf.mxu0
        %588 = vdwg.mxu0
        %v589 = vmul.f32 %v586, %v586
        %v590 = vmul.f32 %v586, %v589
        %v591 = vmul.f32 %v590, 0.044715
        %v592 = vadd.f32 %v586, %v591
        %v593 = vmul.f32 %v592, 0.7978846
        %v594 = vtanh.pop %v593
        %v595 = vadd.f32 %v594, 1.0
        %v596 = vmul.f32 %v595, 0.5
        %v597 = vmul.f32 %v586, %v596
        %v598 = vld [vmem:[%s6] sm:$0xf]
        %v599 = vld [vmem:[%s6 + $0x4] sm:$0xf]
        %v600 = vld [vmem:[%s6 + $0x8] sm:$0xf]
        %v601 = vld [vmem:[%s6 + $0xc] sm:$0xf]
        %v602 = vld [vmem:[%s6 + $0x10] sm:$0xf]
        %v603 = vld [vmem:[%s6 + $0x14] sm:$0xf]
        %v604 = vld [vmem:[%s6 + $0x18] sm:$0xf]
        %v605 = vld [vmem:[%s6 + $0x1c] sm:$0xf]
        %v606 = vld [vmem:[%s6 + $0x20] sm:$0x1]
        %v607 = vunpack.c.l.bf16 %v606
        %v608 = vpack.c.bf16 %v597, %v597
        %v609 = vperm.slane %v607, 0
        %v618 = vunpack.c.l.b16 %v598
        %v619 = vunpack.c.l.b16 %v599
        %v620 = vunpack.c.l.b16 %v600
        %v621 = vunpack.c.l.b16 %v601
        %v622 = vunpack.c.l.b16 %v602
        %v623 = vunpack.c.l.b16 %v603
        %v624 = vunpack.c.l.b16 %v604
        %v625 = vunpack.c.l.b16 %v605
        %v626 = vpack.c.b16 %v619, %v618
        %v627 = vpack.c.b16 %v621, %v620
        %v628 = vpack.c.b16 %v623, %v622
        %v629 = vpack.c.b16 %v625, %v624
        %vm634 = vcmask 523264
        %v636 = vsel %vm634, %v608, 0
        %638 = vmatpush.bf16.msra.mxu0 0
        %639 = vmatpush.bf16.msra.mxu0 0
        %640 = vmatpush.bf16.msra.mxu0 0
        %641 = vmatpush.bf16.msra.mxu0 0
        %642 = vmatpush.bf16.msra.mxu0 %v629
        %643 = vmatpush.bf16.msra.mxu0 %v628
        %644 = vmatpush.bf16.msra.mxu0 %v627
        %645 = vmatpush.bf16.msra.mxu0 %v626
        %646 = vmatmul.bf16.gmra.mxu0 %v636
        %v647 = vpop.f32.mrf.mxu0
        %v648 = vadd.f32 %v609, %v647
        %v649 = vpop.f32.mrf.mxu0
        %650 = vdwg.mxu0
        %v651 = vadd.f32 %v552, %v648
        %v652 = vld [vmem:[#allocation7 + $0x2] sm:$0x1]
        %v653 = vld [vmem:[#allocation7 + $0x3] sm:$0x1]
        %v654 = vsel %vm400, %v651, 0.0
        %655 = vadd.xlane.f32.xlu0 %v654
        %v656 = vpop.xlane.xlu0 %655
        %v657 = vmul.f32 %v656, %v526
        %v658 = vmul.f32 %v651, %v651
        %v659 = vsel %vm400, %v658, 0.0
        %660 = vadd.xlane.f32.xlu0 %v659
        %v661 = vpop.xlane.xlu0 %660
        %v662 = vmul.f32 %v661, %v526
        %v663 = vmul.f32 %v657, %v657
        %v664 = vsub.f32 %v662, %v663
        %v665 = vmax.f32 %v664, 0.0
        %v666 = vsub.f32 %v651, %v657
        %v667 = vperm.slane %v652, 0
        %v668 = vmul.f32 %v667, %v666
        %v669 = vadd.f32 %v665, 1e-12
        %v670 = vrsqrt.pop %v669
        %v671 = vmul.f32 %v670, %v669
        %v672 = vmul.f32 %v671, %v670
        %v673 = vmul.f32 0.5, %v672
        %v674 = vsub.f32 1.5, %v673
        %v675 = vmul.f32 %v670, %v674
        %vm676 = vweird.f32 %v669
        %vm677 = vweird.f32 %v670
        %vm678 = vmor %vm676, %vm677
        %v679 = vsel %vm678, %v670, %v675
        %v680 = vmul.f32 %v668, %v679
        %v681 = vperm.slane %v653, 0
        %v682 = vadd.f32 %v680, %v681
        %v684 = vsel %vm443, %v379, 0
        %686 = vmatpush.msra.mxu0 0.0
        %687 = vmatpush.msra.mxu0 0.0
        %688 = vmatpush.msra.mxu0 0.0
        %689 = vmatpush.msra.mxu0 0.0
        %690 = vmatpush.msra.mxu0 0.0
        %691 = vmatpush.msra.mxu0 0.0
        %692 = vmatpush.msra.mxu0 0.0
        %693 = vmatpush.msra.mxu0 0.0
        %694 = vmatpush.msra.mxu0 0.0
        %695 = vmatpush.msra.mxu0 0.0
        %696 = vmatpush.msra.mxu0 0.0
        %697 = vmatpush.msra.mxu0 0.0
        %698 = vmatpush.msra.mxu0 0.0
        %699 = vmatpush.msra.mxu0 0.0
        %700 = vmatpush.msra.mxu0 0.0
        %701 = vmatpush.msra.mxu0 %v682
        %702 = vmatmul.f32.gmra.mxu0 %v684
        %v703 = vpop.f32.mrf.mxu0
        %v704 = vadd.f32 0.0, %v703
        %705 = vdwg.mxu0
        %v706 = vld [vmem:[%s7] sm:$0xf]
        %v707 = vld [vmem:[%s7 + $0x4] sm:$0xf]
        %v708 = vld [vmem:[%s7 + $0x8] sm:$0xf]
        %v709 = vld [vmem:[%s7 + $0xc] sm:$0xf]
        %v710 = vld [vmem:[%s7 + $0x10] sm:$0xf]
        %v711 = vld [vmem:[%s7 + $0x14] sm:$0xf]
        %v712 = vld [vmem:[%s7 + $0x18] sm:$0xf]
        %v713 = vld [vmem:[%s7 + $0x1c] sm:$0xf]
        %v714 = vld [vmem:[%s7 + $0x20] sm:$0x1]
        %v715 = vunpack.c.l.bf16 %v714
        %v716 = vpack.c.bf16 %v682, %v682
        %v717 = vpack.c.bf16 %v704, %v704
        %v722 = vunpack.c.l.b16 %v710
        %v723 = vunpack.c.l.b16 %v711
        %v724 = vunpack.c.l.b16 %v712
        %v725 = vunpack.c.l.b16 %v713
        %v726 = vpack.c.b16 %v723, %v722
        %v727 = vpack.c.b16 %v725, %v724
        %v731 = vsel %vm400, %v717, 0
        %733 = vmatpush.bf16.msra.mxu0 0
        %734 = vmatpush.bf16.msra.mxu0 0
        %735 = vmatpush.bf16.msra.mxu0 0
        %736 = vmatpush.bf16.msra.mxu0 0
        %737 = vmatpush.bf16.msra.mxu0 0
        %738 = vmatpush.bf16.msra.mxu0 0
        %739 = vmatpush.bf16.msra.mxu0 %v727
        %740 = vmatpush.bf16.msra.mxu0 %v726
        %741 = vmatmul.bf16.gmra.mxu0 %v731
        %v742 = vpop.f32.mrf.mxu0
        %v743 = vadd.f32 0.0, %v742
        %v744 = vpop.f32.mrf.mxu0
        %745 = vdwg.mxu0
        %v750 = vunpack.c.l.b16 %v706
        %v751 = vunpack.c.l.b16 %v707
        %v752 = vunpack.c.l.b16 %v708
        %v753 = vunpack.c.l.b16 %v709
        %v754 = vpack.c.b16 %v751, %v750
        %v755 = vpack.c.b16 %v753, %v752
        %v759 = vsel %vm400, %v716, 0
        %761 = vmatpush.bf16.msra.mxu0 0
        %762 = vmatpush.bf16.msra.mxu0 0
        %763 = vmatpush.bf16.msra.mxu0 0
        %764 = vmatpush.bf16.msra.mxu0 0
        %765 = vmatpush.bf16.msra.mxu0 0
        %766 = vmatpush.bf16.msra.mxu0 0
        %767 = vmatpush.bf16.msra.mxu0 %v755
        %768 = vmatpush.bf16.msra.mxu0 %v754
        %769 = vmatmul.bf16.gmra.mxu0 %v759
        %v770 = vpop.f32.mrf.mxu0
        %v771 = vadd.f32 %v743, %v770
        %v772 = vpop.f32.mrf.mxu0
        %773 = vdwg.mxu0
        %v774 = vadd.f32 %v771, %v715
        %v775 = vperm.slane %v774, 0
        %776 = vst [vmem:[%s375] sm:$0xff] %v775
        %s777 = sand.u32 %s214, 1
        %s778 = scalar_lea.sflag [#allocation4], %s777
        %s779 = sand.u32 %s214, 1
        %s780 = smul.addr %s779, 8
        %s781 = scalar_lea.vmem [#allocation8], %s780
        // Predicated region
        $region65: #{tpu_custom_call.1} parent=51 // pred_check
          %p782 = pneg %p224
        $region66: #{tpu_custom_call.1} parent=51 // pred_check_branch
          %784 = sbr.rel (%p782) target = $region68
        $region67: #{tpu_custom_call.1} parent=51 // pred_region
          %786 = vsyncadd %s778, 0
          %s787 = smul.addr %s28, 8
          %s788 = scalar_lea.hbm %s8, %s787
          %s790 = sshll.u32 %s781, 4
          %s791 = int_to_ptr.vmem [resolvable:$true] %s790
          %s792 = sshll.u32 %s788, 4
          %s793 = int_to_ptr.hbm [resolvable:$true] %s792
          %795 = dma.vmem_to_hbm [thread:$0]  %s791, 128, %s793, %s778
        $region68: #{tpu_custom_call.1} parent=51 // pred_fallthru
          _
      $region52: #{tpu_custom_call.1} parent=5 // pred_fallthru
        _
      %p796 = scmp.le.s32.totalorder 2, %s23
      // Predicated region
      $region69: #{tpu_custom_call.1} parent=5 // pred_check
        %p797 = pneg %p796
      $region70: #{tpu_custom_call.1} parent=5 // pred_check_branch
        %799 = sbr.rel (%p797) target = $region72
      $region71: #{tpu_custom_call.1} parent=5 // pred_region
        %s800 = ssub.s32 %s23, 2
        // Predicated region
        $region73: #{tpu_custom_call.1} parent=71 // pred_check
          %p801 = pneg %p230
        $region74: #{tpu_custom_call.1} parent=71 // pred_check_branch
          %803 = sbr.rel (%p801) target = $region76
        $region75: #{tpu_custom_call.1} parent=71 // pred_region
          %s804 = sand.u32 %s215, 1
          %s805 = scalar_lea.sflag [#allocation4], %s804
          %s806 = sand.u32 %s215, 1
          %s807 = smul.addr %s806, 8
          %s808 = scalar_lea.vmem [#allocation8], %s807
          %810 = dma.done %s805, 128
        $region76: #{tpu_custom_call.1} parent=71 // pred_fallthru
          _
      $region72: #{tpu_custom_call.1} parent=5 // pred_fallthru
        _
    $region6: #{tpu_custom_call.1} parent=1 // loop_footer
      %s27 = sadd.s32 1, %s23
    $region7: #{tpu_custom_call.1} parent=1 // loop_footer_branch
      %22 = sbr.rel target = $region3
    $region8: #{tpu_custom_call.1} parent=1 // loop_exit
      _
    %811 = vsyncpa [#allocation3], 1
    %s812 = scalar_lea.sflag [#allocation3], 1
    %813 = vsyncpa %s812, 1
    %814 = vsyncpa [#allocation6], 1
    %s815 = scalar_lea.sflag [#allocation6], 1
    %816 = vsyncpa %s815, 1
    %817 = vsyncpa [#allocation4], 1
    %s818 = scalar_lea.sflag [#allocation4], 1
    %819 = vsyncpa %s818, 1

</llo_original>
